<compile_context>
chip_gen: v6e
topology: v6e:2x2x1
jax: 0.10.0
libtpu: 0.0.40
codegen_flags: <defaults>
</compile_context>

<pallas_src>
import jax
import jax.numpy as jnp
from jax.experimental import pallas as pl
from jax.experimental.pallas import tpu as pltpu

EPS_LN = 1e-5
EPS_BN = 1e-5
EPS_NORM = 1e-12
VMEM_LIMIT_BYTES = 32 * 1024 * 1024  # safe scoped-VMEM limit on v5e / v6e / v7x


def _layernorm(x, g, b):
    mu = jnp.mean(x, axis=-1, keepdims=True)
    var = jnp.mean((x - mu) ** 2, axis=-1, keepdims=True)
    return (x - mu) * jax.lax.rsqrt(var + EPS_LN) * g + b


def _l2_normalize(x):
    # F.normalize(p=2): x / max(||x||, eps)  ==  x * rsqrt(max(||x||^2, eps^2))
    ss = jnp.sum(x * x, axis=-1, keepdims=True)
    return x * jax.lax.rsqrt(jnp.maximum(ss, EPS_NORM * EPS_NORM))


def _dot(x, w):
    # bf16 x bf16 on the MXU, f32 accumulation.
    return jnp.dot(x.astype(w.dtype), w, preferred_element_type=jnp.float32)


# --------------------------------------------------------------------- fused kernel

def _fused_heads_kernel(
    # activations
    lang_ref, pos_ref, neg_ref,
    # domian_lang_fc: LayerNorm -> Linear -> ReLU -> Linear
    ln1g_ref, ln1b_ref, w1_ref, b1_ref, w2_ref, b2_ref,
    # lang_motion_fc: LayerNorm -> ReLU -> Linear(D, D//2)
    ln2g_ref, ln2b_ref, w3_ref, b3_ref,
    # domian_vis_fc_bk: Conv2d(C, D, k=1) on a 1x1 feature map == Linear(C, D)
    wc_ref, bc_ref,
    # vis_motion_fc: BatchNorm1d -> ReLU -> Linear(D, D//2)
    bng_ref, bnb_ref, wm_ref, bm_ref,
    # outputs
    lang_out_ref, vis_out_ref,
    # scratch
    feat_buf,
):
    n = pos_ref.shape[0]

    # ------------- visual branch: pos & neg fused into one [2N, ...] slab -----------
    # Stage the two bf16 feature blocks into a single f32 VMEM slab with two plain,
    # aligned row-range stores so each MXU weight runs exactly once over 2N rows.
    feat_buf[pl.ds(0, n), :] = pos_ref[...].astype(jnp.float32)
    feat_buf[pl.ds(n, n), :] = neg_ref[...].astype(jnp.float32)

    y = _dot(feat_buf[...], wc_ref[...]) + bc_ref[...]            # [2N, D] f32

    # Per-branch BatchNorm1d (train-mode batch statistics) via an iota row mask:
    # rows [0:N] are pos, rows [N:2N] are neg (avoids any unaligned slicing).
    row = jax.lax.broadcasted_iota(jnp.int32, (2 * n, 1), 0)
    is_pos = row < n
    inv_n = 1.0 / float(n)
    sum_p = jnp.sum(jnp.where(is_pos, y, 0.0), axis=0, keepdims=True)
    sum_n = jnp.sum(jnp.where(is_pos, 0.0, y), axis=0, keepdims=True)
    mu = jnp.where(is_pos, sum_p, sum_n) * inv_n                  # [2N, D]
    d = y - mu
    d2 = d * d
    ss_p = jnp.sum(jnp.where(is_pos, d2, 0.0), axis=0, keepdims=True)
    ss_n = jnp.sum(jnp.where(is_pos, 0.0, d2), axis=0, keepdims=True)
    var = jnp.where(is_pos, ss_p, ss_n) * inv_n                   # biased var (train mode)
    y = d * jax.lax.rsqrt(var + EPS_BN) * bng_ref[...] + bnb_ref[...]
    y = jnp.maximum(y, 0.0)
    v = _dot(y, wm_ref[...]) + bm_ref[...]                        # [2N, Dh] f32
    vis_out_ref[...] = _l2_normalize(v)

    # ------------- language branch ---------------------------------------------------
    x = lang_ref[...]                                             # [B, D] (seq-mean in wrapper)
    x = _layernorm(x, ln1g_ref[...], ln1b_ref[...])
    x = _dot(x, w1_ref[...]) + b1_ref[...]
    x = jnp.maximum(x, 0.0)
    x = _dot(x, w2_ref[...]) + b2_ref[...]
    x = _layernorm(x, ln2g_ref[...], ln2b_ref[...])
    x = jnp.maximum(x, 0.0)
    x = _dot(x, w3_ref[...]) + b3_ref[...]
    lang_out_ref[...] = _l2_normalize(x)


# --------------------------------------------------------------------- wrappers

def fused_heads(lang_mean, pos_feat, neg_feat, p):
    B, D = lang_mean.shape
    N, C = pos_feat.shape
    Dh = p["w3"].shape[1]

    args = (lang_mean, pos_feat, neg_feat,
            p["ln1_g"], p["ln1_b"], p["w1"], p["b1"], p["w2"], p["b2"],
            p["ln2_g"], p["ln2_b"], p["w3"], p["b3"],
            p["wconv"], p["bconv"],
            p["bn_g"], p["bn_b"], p["wm"], p["bm"])

    flops = (2 * (2 * N) * (C * D + D * Dh)            # visual branch
             + 2 * B * (2 * D * D + D * Dh))           # language branch
    transcendentals = 2 * D + 2 * N + 3 * B            # BN rsqrt + l2 rsqrt + LN rsqrt
    bytes_accessed = (sum(int(a.size) * a.dtype.itemsize for a in args)
                      + (B * Dh + 2 * N * Dh) * 4)

    lang_out, vis_out = pl.pallas_call(
        _fused_heads_kernel,
        out_shape=(jax.ShapeDtypeStruct((B, Dh), jnp.float32),
                   jax.ShapeDtypeStruct((2 * N, Dh), jnp.float32)),
        scratch_shapes=[pltpu.VMEM((2 * N, C), jnp.float32)],
        compiler_params=pltpu.CompilerParams(vmem_limit_bytes=VMEM_LIMIT_BYTES),
        cost_estimate=pl.CostEstimate(flops=int(flops),
                                      transcendentals=int(transcendentals),
                                      bytes_accessed=int(bytes_accessed)),
    )(*args)
    return lang_out, vis_out


def triplet_forward(params, lang_hidden, motion_pos_feat, motion_neg_feat):
    # Glue kept in the wrapper (cheap XLA ops; keeps [B,S,D] / NCHW singletons out of
    # the kernel DMA).  torch.mean over the sequence is unmasked in the reference, so
    # the plain mean here matches.
    lang_mean = jnp.mean(lang_hidden, axis=1)                       # [B, D]
    N, C = motion_pos_feat.shape[0], motion_pos_feat.shape[1]
    # bf16 cast halves the dominant activation DMA; pos/neg passed separately so there
    # is no jnp.stack HBM round-trip.
    pos = motion_pos_feat.reshape(N, C).astype(jnp.bfloat16)
    neg = motion_neg_feat.reshape(N, C).astype(jnp.bfloat16)

    lang_mo, vis_pn = fused_heads(lang_mean, pos, neg, params)
    vis_pos, vis_neg = vis_pn[:N], vis_pn[N:]
    return ([(vis_pos, vis_neg, lang_mo)], params["logit_scale"])


def init_params(key, embed_dim, img_in_dim):
    D, C = embed_dim, img_in_dim
    Dh = D // 2
    ks = jax.random.split(key, 10)
    scale = 0.02

    def w(k, shape, dtype=jnp.bfloat16):
        return (scale * jax.random.normal(k, shape)).astype(dtype)

    return {
        # domian_lang_fc
        "ln1_g": jnp.ones((1, D), jnp.float32),
        "ln1_b": jnp.zeros((1, D), jnp.float32),
        "w1": w(ks[0], (D, D)), "b1": w(ks[1], (1, D), jnp.float32),
        "w2": w(ks[2], (D, D)), "b2": w(ks[3], (1, D), jnp.float32),
        # lang_motion_fc
        "ln2_g": jnp.ones((1, D), jnp.float32),
        "ln2_b": jnp.zeros((1, D), jnp.float32),
        "w3": w(ks[4], (D, Dh)), "b3": w(ks[5], (1, Dh), jnp.float32),
        # domian_vis_fc_bk (1x1 conv == linear), weights stored [in, out]
        "wconv": w(ks[6], (C, D)), "bconv": w(ks[7], (1, D), jnp.float32),
        # vis_motion_fc
        "bn_g": jnp.ones((1, D), jnp.float32),
        "bn_b": jnp.zeros((1, D), jnp.float32),
        "wm": w(ks[8], (D, Dh)), "bm": w(ks[9], (1, Dh), jnp.float32),
        # logit_scale parameter
        "logit_scale": jnp.ones((), jnp.float32),
    }


if __name__ == "__main__":
    key = jax.random.PRNGKey(0)
    B, S, D = 2, 8, 32           # batch, seq_len, EMBED_DIM (production: 768)
    N, C = 8, 64                 # motion batch, backbone channels (production: 2048)

    k1, k2, k3, kp = jax.random.split(key, 4)
    lang_hidden = jax.random.normal(k1, (B, S, D), jnp.float32)         # BERT last_hidden_state stand-in
    motion_pos_feat = jax.random.normal(k2, (N, C, 1, 1), jnp.float32)  # backbone(motion_pos) stand-in
    motion_neg_feat = jax.random.normal(k3, (N, C, 1, 1), jnp.float32)  # backbone(motion_neg) stand-in

    params = init_params(kp, D, C)

    fwd = jax.jit(triplet_forward)
    out_list, logit_scale = fwd(params, lang_hidden, motion_pos_feat, motion_neg_feat)
    jax.block_until_ready((out_list, logit_scale))

    (vis_pos, vis_neg, lang_mo) = out_list[0]
    assert vis_pos.shape == (N, D // 2)
    assert vis_neg.shape == (N, D // 2)
    assert lang_mo.shape == (B, D // 2)
    assert bool(jnp.all(jnp.isfinite(vis_pos)))
    assert bool(jnp.all(jnp.isfinite(vis_neg)))
    assert bool(jnp.all(jnp.isfinite(lang_mo)))
    print("KERNEL_OK")
</pallas_src>

<mosaic_0001>
module attributes {stable_mosaic.version = 11 : i64} {
  func.func @_fused_heads_kernel(%arg0: memref<2x32xf32, #tpu.memory_space<vmem>>, %arg1: memref<8x64xbf16, #tpu.memory_space<vmem>>, %arg2: memref<8x64xbf16, #tpu.memory_space<vmem>>, %arg3: memref<1x32xf32, #tpu.memory_space<vmem>>, %arg4: memref<1x32xf32, #tpu.memory_space<vmem>>, %arg5: memref<32x32xbf16, #tpu.memory_space<vmem>>, %arg6: memref<1x32xf32, #tpu.memory_space<vmem>>, %arg7: memref<32x32xbf16, #tpu.memory_space<vmem>>, %arg8: memref<1x32xf32, #tpu.memory_space<vmem>>, %arg9: memref<1x32xf32, #tpu.memory_space<vmem>>, %arg10: memref<1x32xf32, #tpu.memory_space<vmem>>, %arg11: memref<32x16xbf16, #tpu.memory_space<vmem>>, %arg12: memref<1x16xf32, #tpu.memory_space<vmem>>, %arg13: memref<64x32xbf16, #tpu.memory_space<vmem>>, %arg14: memref<1x32xf32, #tpu.memory_space<vmem>>, %arg15: memref<1x32xf32, #tpu.memory_space<vmem>>, %arg16: memref<1x32xf32, #tpu.memory_space<vmem>>, %arg17: memref<32x16xbf16, #tpu.memory_space<vmem>>, %arg18: memref<1x16xf32, #tpu.memory_space<vmem>>, %arg19: memref<2x16xf32, #tpu.memory_space<vmem>>, %arg20: memref<16x16xf32, #tpu.memory_space<vmem>>, %arg21: memref<16x64xf32, #tpu.memory_space<vmem>>) attributes {dimension_semantics = [], scalar_prefetch = 0 : i64, scratch_operands = 1 : i64, tpu.core_type = #tpu.core_type<tc>} {
    %c0 = arith.constant 0 : index
    %c0_0 = arith.constant 0 : index
    %0 = vector.load %arg1[%c0, %c0_0] : memref<8x64xbf16, #tpu.memory_space<vmem>>, vector<8x64xbf16>
    %1 = arith.extf %0 : vector<8x64xbf16> to vector<8x64xf32>
    %c0_1 = arith.constant 0 : index
    %c0_2 = arith.constant 0 : index
    %2 = vector.load %arg21[%c0_1, %c0_2] : memref<16x64xf32, #tpu.memory_space<vmem>>, vector<8x64xf32>
    tpu.vector_store %arg21[%c0_1, %c0_2], %1 {strides = array<i32>} : memref<16x64xf32, #tpu.memory_space<vmem>>, vector<8x64xf32>,
    %c0_3 = arith.constant 0 : index
    %c0_4 = arith.constant 0 : index
    %3 = vector.load %arg2[%c0_3, %c0_4] : memref<8x64xbf16, #tpu.memory_space<vmem>>, vector<8x64xbf16>
    %4 = arith.extf %3 : vector<8x64xbf16> to vector<8x64xf32>
    %c8 = arith.constant 8 : index
    %c0_5 = arith.constant 0 : index
    %5 = vector.load %arg21[%c8, %c0_5] : memref<16x64xf32, #tpu.memory_space<vmem>>, vector<8x64xf32>
    tpu.vector_store %arg21[%c8, %c0_5], %4 {strides = array<i32>} : memref<16x64xf32, #tpu.memory_space<vmem>>, vector<8x64xf32>,
    %c0_6 = arith.constant 0 : index
    %c0_7 = arith.constant 0 : index
    %6 = vector.load %arg21[%c0_6, %c0_7] : memref<16x64xf32, #tpu.memory_space<vmem>>, vector<16x64xf32>
    %c0_8 = arith.constant 0 : index
    %c0_9 = arith.constant 0 : index
    %7 = vector.load %arg13[%c0_8, %c0_9] : memref<64x32xbf16, #tpu.memory_space<vmem>>, vector<64x32xbf16>
    %8 = arith.truncf %6 : vector<16x64xf32> to vector<16x64xbf16>
    %cst = arith.constant dense<0.000000e+00> : vector<16x32xf32>
    %9 = tpu.matmul %8, %7, %cst {dimension_numbers = #tpu.dot_dimension_numbers<[1], [0], [0], [1], [0, 0, 1, 1], [], []>} : vector<16x64xbf16>, vector<64x32xbf16>, vector<16x32xf32> -> vector<16x32xf32>
    %c0_10 = arith.constant 0 : index
    %c0_11 = arith.constant 0 : index
    %10 = vector.load %arg14[%c0_10, %c0_11] : memref<1x32xf32, #tpu.memory_space<vmem>>, vector<1x32xf32>
    %11 = vector.broadcast %10 : vector<1x32xf32> to vector<16x32xf32>
    %12 = arith.addf %9, %11 : vector<16x32xf32>
    %13 = tpu.iota {dimensions = array<i32: 0>} : vector<16x1xi32>
    %c8_i32 = arith.constant 8 : i32
    %14 = vector.broadcast %c8_i32 : i32 to vector<16x1xi32>
    %15 = arith.cmpi slt, %13, %14 : vector<16x1xi32>
    %cst_12 = arith.constant 0.000000e+00 : f32
    %16 = vector.shape_cast %15 : vector<16x1xi1> to vector<16x1xi1>
    %17 = vector.broadcast %16 : vector<16x1xi1> to vector<16x32xi1>
    %18 = vector.broadcast %cst_12 : f32 to vector<16x32xf32>
    %19 = arith.select %17, %12, %18 : vector<16x32xi1>, vector<16x32xf32>
    %cst_13 = arith.constant dense<0.000000e+00> : vector<32xf32>
    %20 = vector.multi_reduction <add>, %19, %cst_13 [0] : vector<16x32xf32> to vector<32xf32>
    %21 = vector.shape_cast %20 : vector<32xf32> to vector<1x32xf32>
    %cst_14 = arith.constant 0.000000e+00 : f32
    %22 = vector.shape_cast %15 : vector<16x1xi1> to vector<16x1xi1>
    %23 = vector.broadcast %22 : vector<16x1xi1> to vector<16x32xi1>
    %24 = vector.broadcast %cst_14 : f32 to vector<16x32xf32>
    %25 = arith.select %23, %24, %12 : vector<16x32xi1>, vector<16x32xf32>
    %cst_15 = arith.constant dense<0.000000e+00> : vector<32xf32>
    %26 = vector.multi_reduction <add>, %25, %cst_15 [0] : vector<16x32xf32> to vector<32xf32>
    %27 = vector.shape_cast %26 : vector<32xf32> to vector<1x32xf32>
    %28 = vector.shape_cast %15 : vector<16x1xi1> to vector<16x1xi1>
    %29 = vector.broadcast %28 : vector<16x1xi1> to vector<16x32xi1>
    %30 = vector.shape_cast %21 : vector<1x32xf32> to vector<1x32xf32>
    %31 = vector.broadcast %30 : vector<1x32xf32> to vector<16x32xf32>
    %32 = vector.shape_cast %27 : vector<1x32xf32> to vector<1x32xf32>
    %33 = vector.broadcast %32 : vector<1x32xf32> to vector<16x32xf32>
    %34 = arith.select %29, %31, %33 : vector<16x32xi1>, vector<16x32xf32>
    %cst_16 = arith.constant 1.250000e-01 : f32
    %35 = vector.broadcast %cst_16 : f32 to vector<16x32xf32>
    %36 = arith.mulf %34, %35 : vector<16x32xf32>
    %37 = arith.subf %12, %36 : vector<16x32xf32>
    %38 = arith.mulf %37, %37 : vector<16x32xf32>
    %cst_17 = arith.constant 0.000000e+00 : f32
    %39 = vector.shape_cast %15 : vector<16x1xi1> to vector<16x1xi1>
    %40 = vector.broadcast %39 : vector<16x1xi1> to vector<16x32xi1>
    %41 = vector.broadcast %cst_17 : f32 to vector<16x32xf32>
    %42 = arith.select %40, %38, %41 : vector<16x32xi1>, vector<16x32xf32>
    %cst_18 = arith.constant dense<0.000000e+00> : vector<32xf32>
    %43 = vector.multi_reduction <add>, %42, %cst_18 [0] : vector<16x32xf32> to vector<32xf32>
    %44 = vector.shape_cast %43 : vector<32xf32> to vector<1x32xf32>
    %cst_19 = arith.constant 0.000000e+00 : f32
    %45 = vector.shape_cast %15 : vector<16x1xi1> to vector<16x1xi1>
    %46 = vector.broadcast %45 : vector<16x1xi1> to vector<16x32xi1>
    %47 = vector.broadcast %cst_19 : f32 to vector<16x32xf32>
    %48 = arith.select %46, %47, %38 : vector<16x32xi1>, vector<16x32xf32>
    %cst_20 = arith.constant dense<0.000000e+00> : vector<32xf32>
    %49 = vector.multi_reduction <add>, %48, %cst_20 [0] : vector<16x32xf32> to vector<32xf32>
    %50 = vector.shape_cast %49 : vector<32xf32> to vector<1x32xf32>
    %51 = vector.shape_cast %15 : vector<16x1xi1> to vector<16x1xi1>
    %52 = vector.broadcast %51 : vector<16x1xi1> to vector<16x32xi1>
    %53 = vector.shape_cast %44 : vector<1x32xf32> to vector<1x32xf32>
    %54 = vector.broadcast %53 : vector<1x32xf32> to vector<16x32xf32>
    %55 = vector.shape_cast %50 : vector<1x32xf32> to vector<1x32xf32>
    %56 = vector.broadcast %55 : vector<1x32xf32> to vector<16x32xf32>
    %57 = arith.select %52, %54, %56 : vector<16x32xi1>, vector<16x32xf32>
    %cst_21 = arith.constant 1.250000e-01 : f32
    %58 = vector.broadcast %cst_21 : f32 to vector<16x32xf32>
    %59 = arith.mulf %57, %58 : vector<16x32xf32>
    %cst_22 = arith.constant 9.99999974E-6 : f32
    %60 = vector.broadcast %cst_22 : f32 to vector<16x32xf32>
    %61 = arith.addf %59, %60 : vector<16x32xf32>
    %62 = math.rsqrt %61 : vector<16x32xf32>
    %63 = arith.mulf %37, %62 : vector<16x32xf32>
    %c0_23 = arith.constant 0 : index
    %c0_24 = arith.constant 0 : index
    %64 = vector.load %arg15[%c0_23, %c0_24] : memref<1x32xf32, #tpu.memory_space<vmem>>, vector<1x32xf32>
    %65 = vector.broadcast %64 : vector<1x32xf32> to vector<16x32xf32>
    %66 = arith.mulf %63, %65 : vector<16x32xf32>
    %c0_25 = arith.constant 0 : index
    %c0_26 = arith.constant 0 : index
    %67 = vector.load %arg16[%c0_25, %c0_26] : memref<1x32xf32, #tpu.memory_space<vmem>>, vector<1x32xf32>
    %68 = vector.broadcast %67 : vector<1x32xf32> to vector<16x32xf32>
    %69 = arith.addf %66, %68 : vector<16x32xf32>
    %cst_27 = arith.constant 0.000000e+00 : f32
    %70 = vector.broadcast %cst_27 : f32 to vector<16x32xf32>
    %71 = arith.maximumf %69, %70 : vector<16x32xf32>
    %c0_28 = arith.constant 0 : index
    %c0_29 = arith.constant 0 : index
    %72 = vector.load %arg17[%c0_28, %c0_29] : memref<32x16xbf16, #tpu.memory_space<vmem>>, vector<32x16xbf16>
    %73 = arith.truncf %71 : vector<16x32xf32> to vector<16x32xbf16>
    %cst_30 = arith.constant dense<0.000000e+00> : vector<16x16xf32>
    %74 = tpu.matmul %73, %72, %cst_30 {dimension_numbers = #tpu.dot_dimension_numbers<[1], [0], [0], [1], [0, 0, 1, 1], [], []>} : vector<16x32xbf16>, vector<32x16xbf16>, vector<16x16xf32> -> vector<16x16xf32>
    %c0_31 = arith.constant 0 : index
    %c0_32 = arith.constant 0 : index
    %75 = vector.load %arg18[%c0_31, %c0_32] : memref<1x16xf32, #tpu.memory_space<vmem>>, vector<1x16xf32>
    %76 = vector.broadcast %75 : vector<1x16xf32> to vector<16x16xf32>
    %77 = arith.addf %74, %76 : vector<16x16xf32>
    %78 = arith.mulf %77, %77 : vector<16x16xf32>
    %cst_33 = arith.constant dense<0.000000e+00> : vector<16xf32>
    %79 = vector.multi_reduction <add>, %78, %cst_33 [1] : vector<16x16xf32> to vector<16xf32>
    %80 = vector.shape_cast %79 : vector<16xf32> to vector<16x1xf32>
    %cst_34 = arith.constant 1.000000e-24 : f32
    %81 = vector.broadcast %cst_34 : f32 to vector<16x1xf32>
    %82 = arith.maximumf %80, %81 : vector<16x1xf32>
    %83 = math.rsqrt %82 : vector<16x1xf32>
    %84 = vector.broadcast %83 : vector<16x1xf32> to vector<16x16xf32>
    %85 = arith.mulf %77, %84 : vector<16x16xf32>
    %c0_35 = arith.constant 0 : index
    %c0_36 = arith.constant 0 : index
    %86 = vector.load %arg20[%c0_35, %c0_36] : memref<16x16xf32, #tpu.memory_space<vmem>>, vector<16x16xf32>
    tpu.vector_store %arg20[%c0_35, %c0_36], %85 {strides = array<i32>} : memref<16x16xf32, #tpu.memory_space<vmem>>, vector<16x16xf32>,
    %c0_37 = arith.constant 0 : index
    %c0_38 = arith.constant 0 : index
    %87 = vector.load %arg0[%c0_37, %c0_38] : memref<2x32xf32, #tpu.memory_space<vmem>>, vector<2x32xf32>
    %c0_39 = arith.constant 0 : index
    %c0_40 = arith.constant 0 : index
    %88 = vector.load %arg3[%c0_39, %c0_40] : memref<1x32xf32, #tpu.memory_space<vmem>>, vector<1x32xf32>
    %c0_41 = arith.constant 0 : index
    %c0_42 = arith.constant 0 : index
    %89 = vector.load %arg4[%c0_41, %c0_42] : memref<1x32xf32, #tpu.memory_space<vmem>>, vector<1x32xf32>
    %cst_43 = arith.constant dense<0.000000e+00> : vector<2xf32>
    %90 = vector.multi_reduction <add>, %87, %cst_43 [1] : vector<2x32xf32> to vector<2xf32>
    %91 = vector.shape_cast %90 : vector<2xf32> to vector<2x1xf32>
    %cst_44 = arith.constant 3.200000e+01 : f32
    %92 = vector.broadcast %cst_44 : f32 to vector<2x1xf32>
    %93 = arith.divf %91, %92 : vector<2x1xf32>
    %94 = vector.broadcast %93 : vector<2x1xf32> to vector<2x32xf32>
    %95 = arith.subf %87, %94 : vector<2x32xf32>
    %96 = arith.mulf %95, %95 : vector<2x32xf32>
    %cst_45 = arith.constant dense<0.000000e+00> : vector<2xf32>
    %97 = vector.multi_reduction <add>, %96, %cst_45 [1] : vector<2x32xf32> to vector<2xf32>
    %98 = vector.shape_cast %97 : vector<2xf32> to vector<2x1xf32>
    %cst_46 = arith.constant 3.200000e+01 : f32
    %99 = vector.broadcast %cst_46 : f32 to vector<2x1xf32>
    %100 = arith.divf %98, %99 : vector<2x1xf32>
    %101 = vector.broadcast %93 : vector<2x1xf32> to vector<2x32xf32>
    %102 = arith.subf %87, %101 : vector<2x32xf32>
    %cst_47 = arith.constant 9.99999974E-6 : f32
    %103 = vector.broadcast %cst_47 : f32 to vector<2x1xf32>
    %104 = arith.addf %100, %103 : vector<2x1xf32>
    %105 = math.rsqrt %104 : vector<2x1xf32>
    %106 = vector.broadcast %105 : vector<2x1xf32> to vector<2x32xf32>
    %107 = arith.mulf %102, %106 : vector<2x32xf32>
    %108 = vector.broadcast %88 : vector<1x32xf32> to vector<2x32xf32>
    %109 = arith.mulf %107, %108 : vector<2x32xf32>
    %110 = vector.broadcast %89 : vector<1x32xf32> to vector<2x32xf32>
    %111 = arith.addf %109, %110 : vector<2x32xf32>
    %c0_48 = arith.constant 0 : index
    %c0_49 = arith.constant 0 : index
    %112 = vector.load %arg5[%c0_48, %c0_49] : memref<32x32xbf16, #tpu.memory_space<vmem>>, vector<32x32xbf16>
    %113 = arith.truncf %111 : vector<2x32xf32> to vector<2x32xbf16>
    %cst_50 = arith.constant dense<0.000000e+00> : vector<2x32xf32>
    %114 = tpu.matmul %113, %112, %cst_50 {dimension_numbers = #tpu.dot_dimension_numbers<[1], [0], [0], [1], [0, 0, 1, 1], [], []>} : vector<2x32xbf16>, vector<32x32xbf16>, vector<2x32xf32> -> vector<2x32xf32>
    %c0_51 = arith.constant 0 : index
    %c0_52 = arith.constant 0 : index
    %115 = vector.load %arg6[%c0_51, %c0_52] : memref<1x32xf32, #tpu.memory_space<vmem>>, vector<1x32xf32>
    %116 = vector.broadcast %115 : vector<1x32xf32> to vector<2x32xf32>
    %117 = arith.addf %114, %116 : vector<2x32xf32>
    %cst_53 = arith.constant 0.000000e+00 : f32
    %118 = vector.broadcast %cst_53 : f32 to vector<2x32xf32>
    %119 = arith.maximumf %117, %118 : vector<2x32xf32>
    %c0_54 = arith.constant 0 : index
    %c0_55 = arith.constant 0 : index
    %120 = vector.load %arg7[%c0_54, %c0_55] : memref<32x32xbf16, #tpu.memory_space<vmem>>, vector<32x32xbf16>
    %121 = arith.truncf %119 : vector<2x32xf32> to vector<2x32xbf16>
    %cst_56 = arith.constant dense<0.000000e+00> : vector<2x32xf32>
    %122 = tpu.matmul %121, %120, %cst_56 {dimension_numbers = #tpu.dot_dimension_numbers<[1], [0], [0], [1], [0, 0, 1, 1], [], []>} : vector<2x32xbf16>, vector<32x32xbf16>, vector<2x32xf32> -> vector<2x32xf32>
    %c0_57 = arith.constant 0 : index
    %c0_58 = arith.constant 0 : index
    %123 = vector.load %arg8[%c0_57, %c0_58] : memref<1x32xf32, #tpu.memory_space<vmem>>, vector<1x32xf32>
    %124 = vector.broadcast %123 : vector<1x32xf32> to vector<2x32xf32>
    %125 = arith.addf %122, %124 : vector<2x32xf32>
    %c0_59 = arith.constant 0 : index
    %c0_60 = arith.constant 0 : index
    %126 = vector.load %arg9[%c0_59, %c0_60] : memref<1x32xf32, #tpu.memory_space<vmem>>, vector<1x32xf32>
    %c0_61 = arith.constant 0 : index
    %c0_62 = arith.constant 0 : index
    %127 = vector.load %arg10[%c0_61, %c0_62] : memref<1x32xf32, #tpu.memory_space<vmem>>, vector<1x32xf32>
    %cst_63 = arith.constant dense<0.000000e+00> : vector<2xf32>
    %128 = vector.multi_reduction <add>, %125, %cst_63 [1] : vector<2x32xf32> to vector<2xf32>
    %129 = vector.shape_cast %128 : vector<2xf32> to vector<2x1xf32>
    %cst_64 = arith.constant 3.200000e+01 : f32
    %130 = vector.broadcast %cst_64 : f32 to vector<2x1xf32>
    %131 = arith.divf %129, %130 : vector<2x1xf32>
    %132 = vector.broadcast %131 : vector<2x1xf32> to vector<2x32xf32>
    %133 = arith.subf %125, %132 : vector<2x32xf32>
    %134 = arith.mulf %133, %133 : vector<2x32xf32>
    %cst_65 = arith.constant dense<0.000000e+00> : vector<2xf32>
    %135 = vector.multi_reduction <add>, %134, %cst_65 [1] : vector<2x32xf32> to vector<2xf32>
    %136 = vector.shape_cast %135 : vector<2xf32> to vector<2x1xf32>
    %cst_66 = arith.constant 3.200000e+01 : f32
    %137 = vector.broadcast %cst_66 : f32 to vector<2x1xf32>
    %138 = arith.divf %136, %137 : vector<2x1xf32>
    %139 = vector.broadcast %131 : vector<2x1xf32> to vector<2x32xf32>
    %140 = arith.subf %125, %139 : vector<2x32xf32>
    %cst_67 = arith.constant 9.99999974E-6 : f32
    %141 = vector.broadcast %cst_67 : f32 to vector<2x1xf32>
    %142 = arith.addf %138, %141 : vector<2x1xf32>
    %143 = math.rsqrt %142 : vector<2x1xf32>
    %144 = vector.broadcast %143 : vector<2x1xf32> to vector<2x32xf32>
    %145 = arith.mulf %140, %144 : vector<2x32xf32>
    %146 = vector.broadcast %126 : vector<1x32xf32> to vector<2x32xf32>
    %147 = arith.mulf %145, %146 : vector<2x32xf32>
    %148 = vector.broadcast %127 : vector<1x32xf32> to vector<2x32xf32>
    %149 = arith.addf %147, %148 : vector<2x32xf32>
    %cst_68 = arith.constant 0.000000e+00 : f32
    %150 = vector.broadcast %cst_68 : f32 to vector<2x32xf32>
    %151 = arith.maximumf %149, %150 : vector<2x32xf32>
    %c0_69 = arith.constant 0 : index
    %c0_70 = arith.constant 0 : index
    %152 = vector.load %arg11[%c0_69, %c0_70] : memref<32x16xbf16, #tpu.memory_space<vmem>>, vector<32x16xbf16>
    %153 = arith.truncf %151 : vector<2x32xf32> to vector<2x32xbf16>
    %cst_71 = arith.constant dense<0.000000e+00> : vector<2x16xf32>
    %154 = tpu.matmul %153, %152, %cst_71 {dimension_numbers = #tpu.dot_dimension_numbers<[1], [0], [0], [1], [0, 0, 1, 1], [], []>} : vector<2x32xbf16>, vector<32x16xbf16>, vector<2x16xf32> -> vector<2x16xf32>
    %c0_72 = arith.constant 0 : index
    %c0_73 = arith.constant 0 : index
    %155 = vector.load %arg12[%c0_72, %c0_73] : memref<1x16xf32, #tpu.memory_space<vmem>>, vector<1x16xf32>
    %156 = vector.broadcast %155 : vector<1x16xf32> to vector<2x16xf32>
    %157 = arith.addf %154, %156 : vector<2x16xf32>
    %158 = arith.mulf %157, %157 : vector<2x16xf32>
    %cst_74 = arith.constant dense<0.000000e+00> : vector<2xf32>
    %159 = vector.multi_reduction <add>, %158, %cst_74 [1] : vector<2x16xf32> to vector<2xf32>
    %160 = vector.shape_cast %159 : vector<2xf32> to vector<2x1xf32>
    %cst_75 = arith.constant 1.000000e-24 : f32
    %161 = vector.broadcast %cst_75 : f32 to vector<2x1xf32>
    %162 = arith.maximumf %160, %161 : vector<2x1xf32>
    %163 = math.rsqrt %162 : vector<2x1xf32>
    %164 = vector.broadcast %163 : vector<2x1xf32> to vector<2x16xf32>
    %165 = arith.mulf %157, %164 : vector<2x16xf32>
    %c0_76 = arith.constant 0 : index
    %c0_77 = arith.constant 0 : index
    %166 = vector.load %arg19[%c0_76, %c0_77] : memref<2x16xf32, #tpu.memory_space<vmem>>, vector<2x16xf32>
    tpu.vector_store %arg19[%c0_76, %c0_77], %165 {strides = array<i32>} : memref<2x16xf32, #tpu.memory_space<vmem>>, vector<2x16xf32>,
    return
  }
}

</mosaic_0001>

<llo_original>
// kernel: triplet_forward.1
$region0: #{triplet_forward.1}
  #allocation0 [shape = 'u32[]', space=smem, size = 0x4, offset = 0x4, fixed_abs, tag = 'smem constant byte address 0x4 - core index']
  #allocation1 [shape = 'u32[144,128]{1,0:T(1,128)}', space=vmem, size = 0x12000, scoped, tag = 'internal scratch']
  #allocation2 [shape = 'f32[16,64]{1,0:T(8,128)}', space=vmem, size = 0x2000, scoped, tag = 'scratch operand']
  %s0 = inlined_call_operand.vmem [shape: f32[2,32], index: 0, kind: input, shape index: {}]
  %s1 = inlined_call_operand.vmem [shape: bf16[8,64], index: 1, kind: input, shape index: {}]
  %s2 = inlined_call_operand.vmem [shape: bf16[8,64], index: 2, kind: input, shape index: {}]
  %s3 = inlined_call_operand.vmem [shape: f32[1,32], index: 3, kind: input, shape index: {}]
  %s4 = inlined_call_operand.vmem [shape: f32[1,32], index: 4, kind: input, shape index: {}]
  %s5 = inlined_call_operand.vmem [shape: bf16[32,32], index: 5, kind: input, shape index: {}]
  %s6 = inlined_call_operand.vmem [shape: f32[1,32], index: 6, kind: input, shape index: {}]
  %s7 = inlined_call_operand.vmem [shape: bf16[32,32], index: 7, kind: input, shape index: {}]
  %s8 = inlined_call_operand.vmem [shape: f32[1,32], index: 8, kind: input, shape index: {}]
  %s9 = inlined_call_operand.vmem [shape: f32[1,32], index: 9, kind: input, shape index: {}]
  %s10 = inlined_call_operand.vmem [shape: f32[1,32], index: 10, kind: input, shape index: {}]
  %s11 = inlined_call_operand.vmem [shape: bf16[32,16], index: 11, kind: input, shape index: {}]
  %s12 = inlined_call_operand.vmem [shape: f32[1,16], index: 12, kind: input, shape index: {}]
  %s13 = inlined_call_operand.vmem [shape: bf16[64,32], index: 13, kind: input, shape index: {}]
  %s14 = inlined_call_operand.vmem [shape: f32[1,32], index: 14, kind: input, shape index: {}]
  %s15 = inlined_call_operand.vmem [shape: f32[1,32], index: 15, kind: input, shape index: {}]
  %s16 = inlined_call_operand.vmem [shape: f32[1,32], index: 16, kind: input, shape index: {}]
  %s17 = inlined_call_operand.vmem [shape: bf16[32,16], index: 17, kind: input, shape index: {}]
  %s18 = inlined_call_operand.vmem [shape: f32[1,16], index: 18, kind: input, shape index: {}]
  %s19 = inlined_call_operand.hbm [shape: f32[2,16], index: 19, kind: output, shape index: {0}]
  %s20 = inlined_call_operand.vmem [shape: f32[16,16], index: 20, kind: output, shape index: {1}]
  %21 = xla_tuple %s19, %s20
  %s22 = sld [smem:[#allocation0]]
  $region94: #{triplet_forward.1} parent=0
    _
  %s24 = ssub.s32 1, %s22
  %s25 = scalar_select 0, %s24, %s22
  $region1: #{triplet_forward.1} parent=0
    #allocation3 [shape = 'u8[1024]{0}', space=vmem, size = 0x400, scoped, tag = 'output window, operand 0, single buffered']
    #allocation4 [shape = 's32[1]{0}', space=sflag, size = 0x4, scoped, tag = 'scoped memory for triplet_forward.1']
    %26 = vsyncpa [#allocation4], 0
    // Predicated region
    $region2: #{triplet_forward.1} parent=1 // pred_check
      _
    $region3: #{triplet_forward.1} parent=1 // pred_check_branch
      %28 = sbr.rel (0) target = $region5
    $region4: #{triplet_forward.1} parent=1 // pred_region
      _
    $region5: #{triplet_forward.1} parent=1 // pred_fallthru
      _
    // Predicated region
    $region6: #{triplet_forward.1} parent=1 // pred_check
      _
    $region7: #{triplet_forward.1} parent=1 // pred_check_branch
      %30 = sbr.rel (0) target = $region9
    $region8: #{triplet_forward.1} parent=1 // pred_region
      _
    $region9: #{triplet_forward.1} parent=1 // pred_fallthru
      _
    // Predicated region
    $region10: #{triplet_forward.1} parent=1 // pred_check
      _
    $region11: #{triplet_forward.1} parent=1 // pred_check_branch
      %32 = sbr.rel (0) target = $region13
    $region12: #{triplet_forward.1} parent=1 // pred_region
      _
    $region13: #{triplet_forward.1} parent=1 // pred_fallthru
      _
    // Predicated region
    $region14: #{triplet_forward.1} parent=1 // pred_check
      _
    $region15: #{triplet_forward.1} parent=1 // pred_check_branch
      %34 = sbr.rel (0) target = $region17
    $region16: #{triplet_forward.1} parent=1 // pred_region
      _
    $region17: #{triplet_forward.1} parent=1 // pred_fallthru
      _
    // Predicated region
    $region18: #{triplet_forward.1} parent=1 // pred_check
      _
    $region19: #{triplet_forward.1} parent=1 // pred_check_branch
      %36 = sbr.rel (0) target = $region21
    $region20: #{triplet_forward.1} parent=1 // pred_region
      _
    $region21: #{triplet_forward.1} parent=1 // pred_fallthru
      _
    // Predicated region
    $region22: #{triplet_forward.1} parent=1 // pred_check
      _
    $region23: #{triplet_forward.1} parent=1 // pred_check_branch
      %38 = sbr.rel (0) target = $region25
    $region24: #{triplet_forward.1} parent=1 // pred_region
      _
    $region25: #{triplet_forward.1} parent=1 // pred_fallthru
      _
    // Predicated region
    $region26: #{triplet_forward.1} parent=1 // pred_check
      _
    $region27: #{triplet_forward.1} parent=1 // pred_check_branch
      %40 = sbr.rel (0) target = $region29
    $region28: #{triplet_forward.1} parent=1 // pred_region
      _
    $region29: #{triplet_forward.1} parent=1 // pred_fallthru
      _
    // Predicated region
    $region30: #{triplet_forward.1} parent=1 // pred_check
      _
    $region31: #{triplet_forward.1} parent=1 // pred_check_branch
      %42 = sbr.rel (0) target = $region33
    $region32: #{triplet_forward.1} parent=1 // pred_region
      _
    $region33: #{triplet_forward.1} parent=1 // pred_fallthru
      _
    // Predicated region
    $region34: #{triplet_forward.1} parent=1 // pred_check
      _
    $region35: #{triplet_forward.1} parent=1 // pred_check_branch
      %44 = sbr.rel (0) target = $region37
    $region36: #{triplet_forward.1} parent=1 // pred_region
      _
    $region37: #{triplet_forward.1} parent=1 // pred_fallthru
      _
    // Predicated region
    $region38: #{triplet_forward.1} parent=1 // pred_check
      _
    $region39: #{triplet_forward.1} parent=1 // pred_check_branch
      %46 = sbr.rel (0) target = $region41
    $region40: #{triplet_forward.1} parent=1 // pred_region
      _
    $region41: #{triplet_forward.1} parent=1 // pred_fallthru
      _
    // Predicated region
    $region42: #{triplet_forward.1} parent=1 // pred_check
      _
    $region43: #{triplet_forward.1} parent=1 // pred_check_branch
      %48 = sbr.rel (0) target = $region45
    $region44: #{triplet_forward.1} parent=1 // pred_region
      _
    $region45: #{triplet_forward.1} parent=1 // pred_fallthru
      _
    // Predicated region
    $region46: #{triplet_forward.1} parent=1 // pred_check
      _
    $region47: #{triplet_forward.1} parent=1 // pred_check_branch
      %50 = sbr.rel (0) target = $region49
    $region48: #{triplet_forward.1} parent=1 // pred_region
      _
    $region49: #{triplet_forward.1} parent=1 // pred_fallthru
      _
    // Predicated region
    $region50: #{triplet_forward.1} parent=1 // pred_check
      _
    $region51: #{triplet_forward.1} parent=1 // pred_check_branch
      %52 = sbr.rel (0) target = $region53
    $region52: #{triplet_forward.1} parent=1 // pred_region
      _
    $region53: #{triplet_forward.1} parent=1 // pred_fallthru
      _
    // Predicated region
    $region54: #{triplet_forward.1} parent=1 // pred_check
      _
    $region55: #{triplet_forward.1} parent=1 // pred_check_branch
      %54 = sbr.rel (0) target = $region57
    $region56: #{triplet_forward.1} parent=1 // pred_region
      _
    $region57: #{triplet_forward.1} parent=1 // pred_fallthru
      _
    // Predicated region
    $region58: #{triplet_forward.1} parent=1 // pred_check
      _
    $region59: #{triplet_forward.1} parent=1 // pred_check_branch
      %56 = sbr.rel (0) target = $region61
    $region60: #{triplet_forward.1} parent=1 // pred_region
      _
    $region61: #{triplet_forward.1} parent=1 // pred_fallthru
      _
    // Predicated region
    $region62: #{triplet_forward.1} parent=1 // pred_check
      _
    $region63: #{triplet_forward.1} parent=1 // pred_check_branch
      %58 = sbr.rel (0) target = $region65
    $region64: #{triplet_forward.1} parent=1 // pred_region
      _
    $region65: #{triplet_forward.1} parent=1 // pred_fallthru
      _
    // Predicated region
    $region66: #{triplet_forward.1} parent=1 // pred_check
      _
    $region67: #{triplet_forward.1} parent=1 // pred_check_branch
      %60 = sbr.rel (0) target = $region69
    $region68: #{triplet_forward.1} parent=1 // pred_region
      _
    $region69: #{triplet_forward.1} parent=1 // pred_fallthru
      _
    // Predicated region
    $region70: #{triplet_forward.1} parent=1 // pred_check
      _
    $region71: #{triplet_forward.1} parent=1 // pred_check_branch
      %62 = sbr.rel (0) target = $region73
    $region72: #{triplet_forward.1} parent=1 // pred_region
      _
    $region73: #{triplet_forward.1} parent=1 // pred_fallthru
      _
    // Predicated region
    $region74: #{triplet_forward.1} parent=1 // pred_check
      _
    $region75: #{triplet_forward.1} parent=1 // pred_check_branch
      %64 = sbr.rel (0) target = $region77
    $region76: #{triplet_forward.1} parent=1 // pred_region
      _
    $region77: #{triplet_forward.1} parent=1 // pred_fallthru
      _
    %v66 = vld [vmem:[%s1] sm:$0xf]
    %v67 = vunpack.c.l.bf16 %v66
    %vm68 = vcmask 523264
    %69 = vst.msk [vmem:[#allocation2] sm:$0xff] %vm68, %v67
    %v70 = vld [vmem:[%s2] sm:$0xf]
    %v71 = vunpack.c.l.bf16 %v70
    %72 = vst.msk [vmem:[#allocation2 + $0x8] sm:$0xff] %vm68, %v71
    %v73 = vld [vmem:[#allocation2] sm:$0xff]
    %v74 = vld [vmem:[#allocation2 + $0x8] sm:$0xff]
    %v75 = vld [vmem:[%s13] sm:$0xf]
    %v76 = vld [vmem:[%s13 + $0x4] sm:$0xf]
    %v77 = vld [vmem:[%s13 + $0x8] sm:$0xf]
    %v78 = vld [vmem:[%s13 + $0xc] sm:$0xf]
    %v79 = vld [vmem:[%s13 + $0x10] sm:$0xf]
    %v80 = vld [vmem:[%s13 + $0x14] sm:$0xf]
    %v81 = vld [vmem:[%s13 + $0x18] sm:$0xf]
    %v82 = vld [vmem:[%s13 + $0x1c] sm:$0xf]
    %v83 = vpack.c.bf16 %v74, %v73
    %v84 = vld [vmem:[%s14] sm:$0x1]
    %v86 = vlaneseq
    %v87 = vshrl.u32 %v86, 7
    %v88 = vsub.s32 0, %v87
    %v89 = vrot.slane %v84, %v88
    %v99 = vunpack.c.l.b16 %v75
    %v100 = vunpack.c.l.b16 %v76
    %v101 = vunpack.c.l.b16 %v77
    %v102 = vunpack.c.l.b16 %v78
    %v103 = vunpack.c.l.b16 %v79
    %v104 = vunpack.c.l.b16 %v80
    %v105 = vunpack.c.l.b16 %v81
    %v106 = vunpack.c.l.b16 %v82
    %v107 = vpack.c.b16 %v100, %v99
    %v108 = vpack.c.b16 %v102, %v101
    %v109 = vpack.c.b16 %v104, %v103
    %v110 = vpack.c.b16 %v106, %v105
    %v116 = vsel %vm68, %v83, 0
    %118 = vmatprep.subr.bf16.mxu0 0
    %119 = vmatpush1.bf16.msra.mxu0 0
    %120 = vmatprep.subr.bf16.mxu0 0
    %121 = vmatpush1.bf16.msra.mxu0 0
    %122 = vmatprep.subr.bf16.mxu0 0
    %123 = vmatpush1.bf16.msra.mxu0 0
    %124 = vmatprep.subr.bf16.mxu0 0
    %125 = vmatpush1.bf16.msra.mxu0 0
    %126 = vmatprep.subr.bf16.mxu0 0
    %127 = vmatpush1.bf16.msra.mxu0 %v110
    %128 = vmatprep.subr.bf16.mxu0 0
    %129 = vmatpush1.bf16.msra.mxu0 %v109
    %130 = vmatprep.subr.bf16.mxu0 0
    %131 = vmatpush1.bf16.msra.mxu0 %v108
    %132 = vmatprep.subr.bf16.mxu0 0
    %133 = vmatpush1.bf16.msra.mxu0 %v107
    %134 = vmatprep.subr.bf16.mxu0 0
    %135 = vmatpush2.bf16.msra.mxu0 0
    %136 = vmatprep.subr.bf16.mxu0 0
    %137 = vmatpush2.bf16.msra.mxu0 0
    %138 = vmatprep.subr.bf16.mxu0 0
    %139 = vmatpush2.bf16.msra.mxu0 0
    %140 = vmatprep.subr.bf16.mxu0 0
    %141 = vmatpush2.bf16.msra.mxu0 0
    %142 = vmatprep.subr.bf16.mxu0 0
    %143 = vmatpush2.bf16.msra.mxu0 0
    %144 = vmatprep.subr.bf16.mxu0 0
    %145 = vmatpush2.bf16.msra.mxu0 0
    %146 = vmatprep.subr.bf16.mxu0 0
    %147 = vmatpush2.bf16.msra.mxu0 0
    %148 = vmatprep.subr.bf16.mxu0 0
    %149 = vmatpush2.bf16.msra.mxu0 0
    %150 = vmatprep.mubr.bf16.mxu0 0
    %151 = vmatmul.mubr.bf16.gmra.mxu0 %v116
    %v152 = vpop.f32.mrf.mxu0
    %v153 = vadd.f32 %v89, %v152
    %v154 = vpop.f32.mrf.mxu0
    %v155 = vpop.f32.mrf.mxu0
    %v156 = vadd.f32 %v89, %v155
    %v157 = vpop.f32.mrf.mxu0
    %158 = vdwg.mxu0
    %v159 = vlaneseq
    %v160 = vshrl.u32 %v159, 7
    %v161 = vadd.s32 %v160, 8
    %vm162 = vcmp.lt.s32.totalorder %v160, 8
    %vm163 = vcmp.lt.s32.totalorder %v161, 8
    %v164 = vsel %vm162, 1, 0
    %v165 = vsel %vm163, 1, 0
    %vm166 = vcmp.eq.s32.totalorder %v164, 1
    %vm167 = vcmp.eq.s32.totalorder %v165, 1
    %v168 = vsel %vm166, %v153, 0.0
    %v169 = vsel %vm167, %v156, 0.0
    %vm170 = vcmask 261120
    %v171 = vsel %vm170, %v168, 0.0
    %v172 = vsel %vm170, %v169, 0.0
    %v173 = vadd.f32 %v171, %v172
    %v174 = vrot.slane %v173, 4
    %v175 = vadd.f32 %v173, %v174
    %v176 = vrot.slane %v175, 2
    %v177 = vadd.f32 %v175, %v176
    %v178 = vrot.slane %v177, 1
    %v179 = vadd.f32 %v177, %v178
    %v180 = vsel %vm166, 0.0, %v153
    %v181 = vsel %vm167, 0.0, %v156
    %v182 = vsel %vm170, %v180, 0.0
    %v183 = vsel %vm170, %v181, 0.0
    %v184 = vadd.f32 %v182, %v183
    %v185 = vrot.slane %v184, 4
    %v186 = vadd.f32 %v184, %v185
    %v187 = vrot.slane %v186, 2
    %v188 = vadd.f32 %v186, %v187
    %v189 = vrot.slane %v188, 1
    %v190 = vadd.f32 %v188, %v189
    %v191 = vsel %vm166, %v179, %v190
    %v192 = vsel %vm167, %v179, %v190
    %v193 = vmul.f32 %v191, 0.125
    %v194 = vmul.f32 %v192, 0.125
    %v195 = vsub.f32 %v153, %v193
    %v196 = vsub.f32 %v156, %v194
    %v197 = vmul.f32 %v195, %v195
    %v198 = vmul.f32 %v196, %v196
    %v199 = vsel %vm166, %v197, 0.0
    %v200 = vsel %vm167, %v198, 0.0
    %v201 = vsel %vm170, %v199, 0.0
    %v202 = vsel %vm170, %v200, 0.0
    %v203 = vadd.f32 %v201, %v202
    %v204 = vrot.slane %v203, 4
    %v205 = vadd.f32 %v203, %v204
    %v206 = vrot.slane %v205, 2
    %v207 = vadd.f32 %v205, %v206
    %v208 = vrot.slane %v207, 1
    %v209 = vadd.f32 %v207, %v208
    %v210 = vsel %vm166, 0.0, %v197
    %v211 = vsel %vm167, 0.0, %v198
    %v212 = vsel %vm170, %v210, 0.0
    %v213 = vsel %vm170, %v211, 0.0
    %v214 = vadd.f32 %v212, %v213
    %v215 = vrot.slane %v214, 4
    %v216 = vadd.f32 %v214, %v215
    %v217 = vrot.slane %v216, 2
    %v218 = vadd.f32 %v216, %v217
    %v219 = vrot.slane %v218, 1
    %v220 = vadd.f32 %v218, %v219
    %v221 = vsel %vm166, %v209, %v220
    %v222 = vsel %vm167, %v209, %v220
    %v223 = vmul.f32 %v221, 0.125
    %v224 = vmul.f32 %v222, 0.125
    %v225 = vadd.f32 %v223, 1e-05
    %v226 = vadd.f32 %v224, 1e-05
    %v227 = vrsqrt.pop %v225
    %v228 = vrsqrt.pop %v226
    %v229 = vmul.f32 %v195, %v227
    %v230 = vmul.f32 %v196, %v228
    %v231 = vld [vmem:[%s15] sm:$0x1]
    %v233 = vlaneseq
    %v234 = vshrl.u32 %v233, 7
    %v235 = vsub.s32 0, %v234
    %v236 = vrot.slane %v231, %v235
    %v238 = vmul.f32 %v229, %v236
    %v239 = vmul.f32 %v230, %v236
    %v240 = vld [vmem:[%s16] sm:$0x1]
    %v242 = vlaneseq
    %v243 = vshrl.u32 %v242, 7
    %v244 = vsub.s32 0, %v243
    %v245 = vrot.slane %v240, %v244
    %v247 = vadd.f32 %v238, %v245
    %v248 = vadd.f32 %v239, %v245
    %v249 = vmax.f32 %v247, 0.0
    %v250 = vmax.f32 %v248, 0.0
    %v251 = vld [vmem:[%s17] sm:$0xf]
    %v252 = vld [vmem:[%s17 + $0x4] sm:$0xf]
    %v253 = vld [vmem:[%s17 + $0x8] sm:$0xf]
    %v254 = vld [vmem:[%s17 + $0xc] sm:$0xf]
    %v255 = vpack.c.bf16 %v250, %v249
    %v256 = vld [vmem:[%s18] sm:$0x1]
    %v258 = vlaneseq
    %v259 = vshrl.u32 %v258, 7
    %v260 = vsub.s32 0, %v259
    %v261 = vrot.slane %v256, %v260
    %v267 = vunpack.c.l.b16 %v251
    %v268 = vunpack.c.l.b16 %v252
    %v269 = vunpack.c.l.b16 %v253
    %v270 = vunpack.c.l.b16 %v254
    %v271 = vpack.c.b16 %v268, %v267
    %v272 = vpack.c.b16 %v270, %v269
    %v276 = vsel %vm170, %v255, 0
    %278 = vmatprep.subr.bf16.mxu0 0
    %279 = vmatpush1.bf16.msra.mxu0 0
    %280 = vmatprep.subr.bf16.mxu0 0
    %281 = vmatpush1.bf16.msra.mxu0 0
    %282 = vmatprep.subr.bf16.mxu0 0
    %283 = vmatpush1.bf16.msra.mxu0 0
    %284 = vmatprep.subr.bf16.mxu0 0
    %285 = vmatpush1.bf16.msra.mxu0 0
    %286 = vmatprep.subr.bf16.mxu0 0
    %287 = vmatpush1.bf16.msra.mxu0 0
    %288 = vmatprep.subr.bf16.mxu0 0
    %289 = vmatpush1.bf16.msra.mxu0 0
    %290 = vmatprep.subr.bf16.mxu0 0
    %291 = vmatpush1.bf16.msra.mxu0 %v272
    %292 = vmatprep.subr.bf16.mxu0 0
    %293 = vmatpush1.bf16.msra.mxu0 %v271
    %294 = vmatprep.subr.bf16.mxu0 0
    %295 = vmatpush2.bf16.msra.mxu0 0
    %296 = vmatprep.subr.bf16.mxu0 0
    %297 = vmatpush2.bf16.msra.mxu0 0
    %298 = vmatprep.subr.bf16.mxu0 0
    %299 = vmatpush2.bf16.msra.mxu0 0
    %300 = vmatprep.subr.bf16.mxu0 0
    %301 = vmatpush2.bf16.msra.mxu0 0
    %302 = vmatprep.subr.bf16.mxu0 0
    %303 = vmatpush2.bf16.msra.mxu0 0
    %304 = vmatprep.subr.bf16.mxu0 0
    %305 = vmatpush2.bf16.msra.mxu0 0
    %306 = vmatprep.subr.bf16.mxu0 0
    %307 = vmatpush2.bf16.msra.mxu0 0
    %308 = vmatprep.subr.bf16.mxu0 0
    %309 = vmatpush2.bf16.msra.mxu0 0
    %310 = vmatprep.mubr.bf16.mxu0 0
    %311 = vmatmul.mubr.bf16.gmra.mxu0 %v276
    %v312 = vpop.f32.mrf.mxu0
    %v313 = vadd.f32 %v261, %v312
    %v314 = vpop.f32.mrf.mxu0
    %v315 = vpop.f32.mrf.mxu0
    %v316 = vadd.f32 %v261, %v315
    %v317 = vpop.f32.mrf.mxu0
    %318 = vdwg.mxu0
    %v319 = vmul.f32 %v313, %v313
    %v320 = vmul.f32 %v316, %v316
    %vm321 = vcmask 130048
    %v322 = vsel %vm321, %v319, 0.0
    %323 = vadd.xlane.f32.xlu0 %v322
    %v324 = vpop.xlane.xlu0 %323
    %v325 = vsel %vm321, %v320, 0.0
    %326 = vadd.xlane.f32.xlu0 %v325
    %v327 = vpop.xlane.xlu0 %326
    %v328 = vmax.f32 %v324, 1e-24
    %v329 = vmax.f32 %v327, 1e-24
    %v330 = vrsqrt.pop %v328
    %v331 = vrsqrt.pop %v329
    %v332 = vmul.f32 %v313, %v330
    %v333 = vmul.f32 %v316, %v331
    %334 = vst.msk [vmem:[%s20] sm:$0xff] %vm321, %v332
    %335 = vst.msk [vmem:[%s20 + $0x8] sm:$0xff] %vm321, %v333
    %v336 = vld [vmem:[%s0] sm:$0x3]
    %v337 = vld [vmem:[%s3] sm:$0x1]
    %v338 = vld [vmem:[%s4] sm:$0x1]
    %vm339 = vcmask 254976
    %v340 = vsel %vm339, %v336, 0.0
    %341 = vadd.xlane.f32.xlu0 %v340
    %v342 = vpop.xlane.xlu0 %341
    %v343 = vrcp.pop 32.0
    %v344 = vmul.f32 %v342, %v343
    %v345 = vsub.f32 %v336, %v344
    %v346 = vmul.f32 %v345, %v345
    %v347 = vsel %vm339, %v346, 0.0
    %348 = vadd.xlane.f32.xlu0 %v347
    %v349 = vpop.xlane.xlu0 %348
    %v350 = vmul.f32 %v349, %v343
    %v351 = vadd.f32 %v350, 1e-05
    %v352 = vrsqrt.pop %v351
    %v353 = vmul.f32 %v345, %v352
    %v355 = vlaneseq
    %v356 = vshrl.u32 %v355, 7
    %v357 = vsub.s32 0, %v356
    %v358 = vrot.slane %v337, %v357
    %v360 = vmul.f32 %v353, %v358
    %v362 = vlaneseq
    %v363 = vshrl.u32 %v362, 7
    %v364 = vsub.s32 0, %v363
    %v365 = vrot.slane %v338, %v364
    %v367 = vadd.f32 %v360, %v365
    %v368 = vld [vmem:[%s5] sm:$0xf]
    %v369 = vld [vmem:[%s5 + $0x4] sm:$0xf]
    %v370 = vld [vmem:[%s5 + $0x8] sm:$0xf]
    %v371 = vld [vmem:[%s5 + $0xc] sm:$0xf]
    %v372 = vpack.c.bf16 %v367, %v367
    %v373 = vld [vmem:[%s6] sm:$0x1]
    %v375 = vlaneseq
    %v376 = vshrl.u32 %v375, 7
    %v377 = vsub.s32 0, %v376
    %v378 = vrot.slane %v373, %v377
    %v384 = vunpack.c.l.b16 %v368
    %v385 = vunpack.c.l.b16 %v369
    %v386 = vunpack.c.l.b16 %v370
    %v387 = vunpack.c.l.b16 %v371
    %v388 = vpack.c.b16 %v385, %v384
    %v389 = vpack.c.b16 %v387, %v386
    %v393 = vsel %vm170, %v372, 0
    %395 = vmatprep.subr.bf16.mxu0 0
    %396 = vmatpush1.bf16.msra.mxu0 0
    %397 = vmatprep.subr.bf16.mxu0 0
    %398 = vmatpush1.bf16.msra.mxu0 0
    %399 = vmatprep.subr.bf16.mxu0 0
    %400 = vmatpush1.bf16.msra.mxu0 0
    %401 = vmatprep.subr.bf16.mxu0 0
    %402 = vmatpush1.bf16.msra.mxu0 0
    %403 = vmatprep.subr.bf16.mxu0 0
    %404 = vmatpush1.bf16.msra.mxu0 0
    %405 = vmatprep.subr.bf16.mxu0 0
    %406 = vmatpush1.bf16.msra.mxu0 0
    %407 = vmatprep.subr.bf16.mxu0 0
    %408 = vmatpush1.bf16.msra.mxu0 %v389
    %409 = vmatprep.subr.bf16.mxu0 0
    %410 = vmatpush1.bf16.msra.mxu0 %v388
    %411 = vmatprep.subr.bf16.mxu0 0
    %412 = vmatpush2.bf16.msra.mxu0 0
    %413 = vmatprep.subr.bf16.mxu0 0
    %414 = vmatpush2.bf16.msra.mxu0 0
    %415 = vmatprep.subr.bf16.mxu0 0
    %416 = vmatpush2.bf16.msra.mxu0 0
    %417 = vmatprep.subr.bf16.mxu0 0
    %418 = vmatpush2.bf16.msra.mxu0 0
    %419 = vmatprep.subr.bf16.mxu0 0
    %420 = vmatpush2.bf16.msra.mxu0 0
    %421 = vmatprep.subr.bf16.mxu0 0
    %422 = vmatpush2.bf16.msra.mxu0 0
    %423 = vmatprep.subr.bf16.mxu0 0
    %424 = vmatpush2.bf16.msra.mxu0 0
    %425 = vmatprep.subr.bf16.mxu0 0
    %426 = vmatpush2.bf16.msra.mxu0 0
    %427 = vmatprep.mubr.bf16.mxu0 0
    %428 = vmatmul.mubr.bf16.gmra.mxu0 %v393
    %v429 = vpop.f32.mrf.mxu0
    %v430 = vadd.f32 %v378, %v429
    %v431 = vpop.f32.mrf.mxu0
    %v432 = vpop.f32.mrf.mxu0
    %v433 = vpop.f32.mrf.mxu0
    %434 = vdwg.mxu0
    %v435 = vmax.f32 %v430, 0.0
    %v436 = vld [vmem:[%s7] sm:$0xf]
    %v437 = vld [vmem:[%s7 + $0x4] sm:$0xf]
    %v438 = vld [vmem:[%s7 + $0x8] sm:$0xf]
    %v439 = vld [vmem:[%s7 + $0xc] sm:$0xf]
    %v440 = vpack.c.bf16 %v435, %v435
    %v441 = vld [vmem:[%s8] sm:$0x1]
    %v443 = vlaneseq
    %v444 = vshrl.u32 %v443, 7
    %v445 = vsub.s32 0, %v444
    %v446 = vrot.slane %v441, %v445
    %v452 = vunpack.c.l.b16 %v436
    %v453 = vunpack.c.l.b16 %v437
    %v454 = vunpack.c.l.b16 %v438
    %v455 = vunpack.c.l.b16 %v439
    %v456 = vpack.c.b16 %v453, %v452
    %v457 = vpack.c.b16 %v455, %v454
    %v461 = vsel %vm170, %v440, 0
    %463 = vmatprep.subr.bf16.mxu0 0
    %464 = vmatpush1.bf16.msra.mxu0 0
    %465 = vmatprep.subr.bf16.mxu0 0
    %466 = vmatpush1.bf16.msra.mxu0 0
    %467 = vmatprep.subr.bf16.mxu0 0
    %468 = vmatpush1.bf16.msra.mxu0 0
    %469 = vmatprep.subr.bf16.mxu0 0
    %470 = vmatpush1.bf16.msra.mxu0 0
    %471 = vmatprep.subr.bf16.mxu0 0
    %472 = vmatpush1.bf16.msra.mxu0 0
    %473 = vmatprep.subr.bf16.mxu0 0
    %474 = vmatpush1.bf16.msra.mxu0 0
    %475 = vmatprep.subr.bf16.mxu0 0
    %476 = vmatpush1.bf16.msra.mxu0 %v457
    %477 = vmatprep.subr.bf16.mxu0 0
    %478 = vmatpush1.bf16.msra.mxu0 %v456
    %479 = vmatprep.subr.bf16.mxu0 0
    %480 = vmatpush2.bf16.msra.mxu0 0
    %481 = vmatprep.subr.bf16.mxu0 0
    %482 = vmatpush2.bf16.msra.mxu0 0
    %483 = vmatprep.subr.bf16.mxu0 0
    %484 = vmatpush2.bf16.msra.mxu0 0
    %485 = vmatprep.subr.bf16.mxu0 0
    %486 = vmatpush2.bf16.msra.mxu0 0
    %487 = vmatprep.subr.bf16.mxu0 0
    %488 = vmatpush2.bf16.msra.mxu0 0
    %489 = vmatprep.subr.bf16.mxu0 0
    %490 = vmatpush2.bf16.msra.mxu0 0
    %491 = vmatprep.subr.bf16.mxu0 0
    %492 = vmatpush2.bf16.msra.mxu0 0
    %493 = vmatprep.subr.bf16.mxu0 0
    %494 = vmatpush2.bf16.msra.mxu0 0
    %495 = vmatprep.mubr.bf16.mxu0 0
    %496 = vmatmul.mubr.bf16.gmra.mxu0 %v461
    %v497 = vpop.f32.mrf.mxu0
    %v498 = vadd.f32 %v446, %v497
    %v499 = vpop.f32.mrf.mxu0
    %v500 = vpop.f32.mrf.mxu0
    %v501 = vpop.f32.mrf.mxu0
    %502 = vdwg.mxu0
    %v503 = vld [vmem:[%s9] sm:$0x1]
    %v504 = vld [vmem:[%s10] sm:$0x1]
    %v505 = vsel %vm339, %v498, 0.0
    %506 = vadd.xlane.f32.xlu0 %v505
    %v507 = vpop.xlane.xlu0 %506
    %v508 = vmul.f32 %v507, %v343
    %v509 = vsub.f32 %v498, %v508
    %v510 = vmul.f32 %v509, %v509
    %v511 = vsel %vm339, %v510, 0.0
    %512 = vadd.xlane.f32.xlu0 %v511
    %v513 = vpop.xlane.xlu0 %512
    %v514 = vmul.f32 %v513, %v343
    %v515 = vadd.f32 %v514, 1e-05
    %v516 = vrsqrt.pop %v515
    %v517 = vmul.f32 %v509, %v516
    %v519 = vlaneseq
    %v520 = vshrl.u32 %v519, 7
    %v521 = vsub.s32 0, %v520
    %v522 = vrot.slane %v503, %v521
    %v524 = vmul.f32 %v517, %v522
    %v526 = vlaneseq
    %v527 = vshrl.u32 %v526, 7
    %v528 = vsub.s32 0, %v527
    %v529 = vrot.slane %v504, %v528
    %v531 = vadd.f32 %v524, %v529
    %v532 = vmax.f32 %v531, 0.0
    %v533 = vld [vmem:[%s11] sm:$0xf]
    %v534 = vld [vmem:[%s11 + $0x4] sm:$0xf]
    %v535 = vld [vmem:[%s11 + $0x8] sm:$0xf]
    %v536 = vld [vmem:[%s11 + $0xc] sm:$0xf]
    %v537 = vpack.c.bf16 %v532, %v532
    %v538 = vld [vmem:[%s12] sm:$0x1]
    %v540 = vlaneseq
    %v541 = vshrl.u32 %v540, 7
    %v542 = vsub.s32 0, %v541
    %v543 = vrot.slane %v538, %v542
    %v549 = vunpack.c.l.b16 %v533
    %v550 = vunpack.c.l.b16 %v534
    %v551 = vunpack.c.l.b16 %v535
    %v552 = vunpack.c.l.b16 %v536
    %v553 = vpack.c.b16 %v550, %v549
    %v554 = vpack.c.b16 %v552, %v551
    %v558 = vsel %vm170, %v537, 0
    %560 = vmatprep.subr.bf16.mxu0 0
    %561 = vmatpush1.bf16.msra.mxu0 0
    %562 = vmatprep.subr.bf16.mxu0 0
    %563 = vmatpush1.bf16.msra.mxu0 0
    %564 = vmatprep.subr.bf16.mxu0 0
    %565 = vmatpush1.bf16.msra.mxu0 0
    %566 = vmatprep.subr.bf16.mxu0 0
    %567 = vmatpush1.bf16.msra.mxu0 0
    %568 = vmatprep.subr.bf16.mxu0 0
    %569 = vmatpush1.bf16.msra.mxu0 0
    %570 = vmatprep.subr.bf16.mxu0 0
    %571 = vmatpush1.bf16.msra.mxu0 0
    %572 = vmatprep.subr.bf16.mxu0 0
    %573 = vmatpush1.bf16.msra.mxu0 %v554
    %574 = vmatprep.subr.bf16.mxu0 0
    %575 = vmatpush1.bf16.msra.mxu0 %v553
    %576 = vmatprep.subr.bf16.mxu0 0
    %577 = vmatpush2.bf16.msra.mxu0 0
    %578 = vmatprep.subr.bf16.mxu0 0
    %579 = vmatpush2.bf16.msra.mxu0 0
    %580 = vmatprep.subr.bf16.mxu0 0
    %581 = vmatpush2.bf16.msra.mxu0 0
    %582 = vmatprep.subr.bf16.mxu0 0
    %583 = vmatpush2.bf16.msra.mxu0 0
    %584 = vmatprep.subr.bf16.mxu0 0
    %585 = vmatpush2.bf16.msra.mxu0 0
    %586 = vmatprep.subr.bf16.mxu0 0
    %587 = vmatpush2.bf16.msra.mxu0 0
    %588 = vmatprep.subr.bf16.mxu0 0
    %589 = vmatpush2.bf16.msra.mxu0 0
    %590 = vmatprep.subr.bf16.mxu0 0
    %591 = vmatpush2.bf16.msra.mxu0 0
    %592 = vmatprep.mubr.bf16.mxu0 0
    %593 = vmatmul.mubr.bf16.gmra.mxu0 %v558
    %v594 = vpop.f32.mrf.mxu0
    %v595 = vadd.f32 %v543, %v594
    %v596 = vpop.f32.mrf.mxu0
    %v597 = vpop.f32.mrf.mxu0
    %v598 = vpop.f32.mrf.mxu0
    %599 = vdwg.mxu0
    %v600 = vmul.f32 %v595, %v595
    %vm601 = vcmask 123904
    %v602 = vsel %vm601, %v600, 0.0
    %603 = vadd.xlane.f32.xlu0 %v602
    %v604 = vpop.xlane.xlu0 %603
    %v605 = vmax.f32 %v604, 1e-24
    %v606 = vrsqrt.pop %v605
    %v607 = vmul.f32 %v595, %v606
    %608 = vst.msk [vmem:[#allocation3] sm:$0x3] %vm601, %v607
    // Predicated region
    $region78: #{triplet_forward.1} parent=1 // pred_check
      _
    $region79: #{triplet_forward.1} parent=1 // pred_check_branch
      %610 = sbr.rel (0) target = $region81
    $region80: #{triplet_forward.1} parent=1 // pred_region
      %s612 = ssub.s32 32, 32
      %613 = vsyncadd [#allocation4], %s612
      %s615 = sshll.u32 [#allocation3], 4
      %s616 = int_to_ptr.vmem [resolvable:$true] %s615
      %618 = dma.vmem_to_hbm [thread:$0]  %s616, 32, %s19, [#allocation4]
    $region81: #{triplet_forward.1} parent=1 // pred_fallthru
      _
    // Predicated region
    $region82: #{triplet_forward.1} parent=1 // pred_check
      _
    $region83: #{triplet_forward.1} parent=1 // pred_check_branch
      %620 = sbr.rel (0) target = $region85
    $region84: #{triplet_forward.1} parent=1 // pred_region
      _
    $region85: #{triplet_forward.1} parent=1 // pred_fallthru
      _
    // Predicated region
    $region86: #{triplet_forward.1} parent=1 // pred_check
      _
    $region87: #{triplet_forward.1} parent=1 // pred_check_branch
      %622 = sbr.rel (0) target = $region89
    $region88: #{triplet_forward.1} parent=1 // pred_region
      %623 = dma.done [#allocation4], 32
    $region89: #{triplet_forward.1} parent=1 // pred_fallthru
      _
    // Predicated region
    $region90: #{triplet_forward.1} parent=1 // pred_check
      _
    $region91: #{triplet_forward.1} parent=1 // pred_check_branch
      %625 = sbr.rel (0) target = $region93
    $region92: #{triplet_forward.1} parent=1 // pred_region
      _
    $region93: #{triplet_forward.1} parent=1 // pred_fallthru
      _
    %626 = vsyncpa [#allocation4], 1

</llo_original>
